<compile_context>
chip_gen: v7x
topology: tpu7x:2x2x1
jax: 0.10.0
libtpu: 0.0.40
codegen_flags: <defaults>
</compile_context>

<pallas_src>
import jax
import jax.numpy as jnp
from jax.experimental import pallas as pl
from jax.experimental.pallas import tpu as pltpu

HIDDEN = 128
# Batch tile: 128 rows fills the MXU M-edge on v5e and is f32-sublane aligned on every
# generation (use 256 to fully fill v6e/v7x when batches are large).
TB = 128


def _critic_kernel(x_ref, w1_ref, b1_ref, w2_ref, b2_ref, w3_ref, b3_ref, o_ref):
    # Layer 1: (TB, D) @ (D, 128) on the MXU — bf16 inputs, f32 accumulation — then bias + ReLU.
    x = x_ref[...].astype(jnp.bfloat16)
    h1 = jnp.dot(x, w1_ref[...], preferred_element_type=jnp.float32)
    h1 = jnp.maximum(h1 + b1_ref[...], 0.0)
    # Layer 2: (TB, 128) @ (128, 128).
    h2 = jnp.dot(h1.astype(jnp.bfloat16), w2_ref[...], preferred_element_type=jnp.float32)
    h2 = jnp.maximum(h2 + b2_ref[...], 0.0)
    # Layer 3 has out_features == 1: VPU multiply + lane reduce instead of an N=1 MXU matmul.
    # w3 is a lane-dense (1, 128) row; b3 is an SMEM scalar.
    o_ref[...] = jnp.sum(h2 * w3_ref[...], axis=-1, keepdims=True) + b3_ref[0]


@jax.jit
def _critic_pallas(x, w1, b1, w2, b2, w3, b3):
    """x: (B, D) f32 with B a multiple of TB. Returns (B, 1) f32."""
    b, d = x.shape
    grid = (b // TB,)
    return pl.pallas_call(
        _critic_kernel,
        out_shape=jax.ShapeDtypeStruct((b, 1), jnp.float32),
        grid=grid,
        in_specs=[
            pl.BlockSpec((TB, d), lambda i: (i, 0)),           # x: streamed per batch tile
            pl.BlockSpec((d, HIDDEN), lambda i: (0, 0)),        # w1: VMEM-resident (bf16)
            pl.BlockSpec((1, HIDDEN), lambda i: (0, 0)),        # b1 (f32)
            pl.BlockSpec((HIDDEN, HIDDEN), lambda i: (0, 0)),   # w2: VMEM-resident (bf16)
            pl.BlockSpec((1, HIDDEN), lambda i: (0, 0)),        # b2 (f32)
            pl.BlockSpec((1, HIDDEN), lambda i: (0, 0)),        # w3 row (f32, lane-dense)
            pl.BlockSpec(memory_space=pltpu.SMEM),              # b3 scalar
        ],
        out_specs=pl.BlockSpec((TB, 1), lambda i: (i, 0)),
        compiler_params=pltpu.CompilerParams(
            dimension_semantics=("parallel",)),  # batch tiles shard across TCs on v7x
    )(x, w1, b1, w2, b2, w3, b3)


def critic_forward(x, params):
    """Batched critic: x (B, input_size) f32 -> (B, 1) f32 value estimates."""
    x = jnp.asarray(x, jnp.float32)
    b = x.shape[0]
    b_pad = ((b + TB - 1) // TB) * TB
    if b_pad != b:  # pad batch to a whole tile; padded rows are discarded below
        x = jnp.pad(x, ((0, b_pad - b), (0, 0)))
    out = _critic_pallas(x, *params)
    return out[:b]


def build_state(joint_observation):
    """== PyTorch build_state: concat per-agent observations along dim 0, add batch dim."""
    obs = [jnp.asarray(o, dtype=jnp.float32).reshape(-1) for o in joint_observation]
    state = jnp.concatenate(obs, axis=0)
    return state[None, :]  # (1, input_size)


def critic_apply(joint_observation, params):
    """== Critic.forward: build_state then the 3-layer MLP. Returns (1, 1)."""
    x = build_state(joint_observation)
    return critic_forward(x, params)


def init_critic_params(key, input_size, hidden=HIDDEN):
    """Deterministic init mimicking nn.Linear default (uniform +/- 1/sqrt(fan_in)).

    Layouts chosen for the kernel: w1/w2 (in, out) bf16; b1/b2 (1, out) f32;
    w3 as a lane-dense (1, hidden) f32 row; b3 as a (1,) f32 SMEM scalar.
    """
    ks = jax.random.split(key, 6)

    def lin(kw, kb, fan_in, fan_out):
        bound = 1.0 / jnp.sqrt(jnp.float32(fan_in))
        w = jax.random.uniform(kw, (fan_in, fan_out), jnp.float32, -bound, bound)
        b = jax.random.uniform(kb, (fan_out,), jnp.float32, -bound, bound)
        return w, b

    w1, b1 = lin(ks[0], ks[1], input_size, hidden)
    w2, b2 = lin(ks[2], ks[3], hidden, hidden)
    w3, b3 = lin(ks[4], ks[5], hidden, 1)
    return (w1.astype(jnp.bfloat16), b1.reshape(1, hidden),
            w2.astype(jnp.bfloat16), b2.reshape(1, hidden),
            w3.T.astype(jnp.float32), b3.reshape(1))


def critic_reference(x, w1, b1, w2, b2, w3, b3):
    """Plain-JAX reference doing the identical bf16-weight / f32-accumulate computation."""
    x = jnp.asarray(x, jnp.float32)
    h1 = jnp.maximum(
        jnp.dot(x.astype(jnp.bfloat16), w1, preferred_element_type=jnp.float32) + b1, 0.0)
    h2 = jnp.maximum(
        jnp.dot(h1.astype(jnp.bfloat16), w2, preferred_element_type=jnp.float32) + b2, 0.0)
    return jnp.sum(h2 * w3, axis=-1, keepdims=True) + b3[0]


if __name__ == "__main__":
    key = jax.random.PRNGKey(0)
    k_obs, k_params, k_batch = jax.random.split(key, 3)

    # Joint observation: 2 agents, each with a 16-dim observation -> input_size = 32.
    n_agents, obs_dim = 2, 16
    input_size = n_agents * obs_dim
    params = init_critic_params(k_params, input_size)

    # 1) Module-style forward: single joint observation (padded to one batch tile internally).
    obs_keys = jax.random.split(k_obs, n_agents)
    joint_observation = [jax.random.normal(obs_keys[i], (obs_dim,), jnp.float32)
                         for i in range(n_agents)]
    value = critic_apply(joint_observation, params)
    jax.block_until_ready(value)
    assert value.shape == (1, 1), value.shape
    ref1 = critic_reference(build_state(joint_observation), *params)
    assert jnp.allclose(value, ref1, atol=1e-3, rtol=1e-3), (value, ref1)

    # 2) Batched rollout evaluation: 256 states through one pipelined, gridded call
    #    (weights stay VMEM-resident; x / out tiles stream).
    batch = 2 * TB
    xb = jax.random.normal(k_batch, (batch, input_size), jnp.float32)
    vb = critic_forward(xb, params)
    jax.block_until_ready(vb)
    assert vb.shape == (batch, 1), vb.shape
    refb = critic_reference(xb, *params)
    assert jnp.allclose(vb, refb, atol=1e-3, rtol=1e-3), float(jnp.max(jnp.abs(vb - refb)))

    print("KERNEL_OK")
</pallas_src>

<mosaic_0001>
module attributes {stable_mosaic.version = 11 : i64} {
  func.func @_critic_kernel(%arg0: i32, %arg1: memref<128x32xf32, #tpu.memory_space<vmem>>, %arg2: memref<32x128xbf16, #tpu.memory_space<vmem>>, %arg3: memref<1x128xf32, #tpu.memory_space<vmem>>, %arg4: memref<128x128xbf16, #tpu.memory_space<vmem>>, %arg5: memref<1x128xf32, #tpu.memory_space<vmem>>, %arg6: memref<1x128xf32, #tpu.memory_space<vmem>>, %arg7: memref<1xf32, #tpu.memory_space<smem>>, %arg8: memref<128x1xf32, #tpu.memory_space<vmem>>) attributes {dimension_semantics = [#tpu.dimension_semantics<parallel>], iteration_bounds = array<i64: 1>, scalar_prefetch = 0 : i64, scratch_operands = 0 : i64, tpu.core_type = #tpu.core_type<tc>, window_params = [{transform_indices = @transform_0, window_bounds = array<i64: 128, 32>}, {pipeline_mode = #tpu.pipeline_mode<synchronous>, transform_indices = @transform_1, window_bounds = array<i64: 32, 128>}, {pipeline_mode = #tpu.pipeline_mode<synchronous>, transform_indices = @transform_2, window_bounds = array<i64: 1, 128>}, {pipeline_mode = #tpu.pipeline_mode<synchronous>, transform_indices = @transform_3, window_bounds = array<i64: 128, 128>}, {pipeline_mode = #tpu.pipeline_mode<synchronous>, transform_indices = @transform_4, window_bounds = array<i64: 1, 128>}, {pipeline_mode = #tpu.pipeline_mode<synchronous>, transform_indices = @transform_5, window_bounds = array<i64: 1, 128>}, {transform_indices = @transform_6, window_bounds = array<i64: 1>}, {transform_indices = @transform_7, window_bounds = array<i64: 128, 1>}]} {
    %c0 = arith.constant 0 : index
    %c0_0 = arith.constant 0 : index
    %0 = vector.load %arg1[%c0, %c0_0] : memref<128x32xf32, #tpu.memory_space<vmem>>, vector<128x32xf32>
    %1 = arith.truncf %0 : vector<128x32xf32> to vector<128x32xbf16>
    %c0_1 = arith.constant 0 : index
    %c0_2 = arith.constant 0 : index
    %2 = vector.load %arg2[%c0_1, %c0_2] : memref<32x128xbf16, #tpu.memory_space<vmem>>, vector<32x128xbf16>
    %cst = arith.constant dense<0.000000e+00> : vector<128x128xf32>
    %3 = tpu.matmul %1, %2, %cst {dimension_numbers = #tpu.dot_dimension_numbers<[1], [0], [0], [1], [0, 0, 1, 1], [], []>} : vector<128x32xbf16>, vector<32x128xbf16>, vector<128x128xf32> -> vector<128x128xf32>
    %c0_3 = arith.constant 0 : index
    %c0_4 = arith.constant 0 : index
    %4 = vector.load %arg3[%c0_3, %c0_4] : memref<1x128xf32, #tpu.memory_space<vmem>>, vector<1x128xf32>
    %5 = vector.broadcast %4 : vector<1x128xf32> to vector<128x128xf32>
    %6 = arith.addf %3, %5 : vector<128x128xf32>
    %cst_5 = arith.constant 0.000000e+00 : f32
    %7 = vector.broadcast %cst_5 : f32 to vector<128x128xf32>
    %8 = arith.maximumf %6, %7 : vector<128x128xf32>
    %9 = arith.truncf %8 : vector<128x128xf32> to vector<128x128xbf16>
    %c0_6 = arith.constant 0 : index
    %c0_7 = arith.constant 0 : index
    %10 = vector.load %arg4[%c0_6, %c0_7] : memref<128x128xbf16, #tpu.memory_space<vmem>>, vector<128x128xbf16>
    %cst_8 = arith.constant dense<0.000000e+00> : vector<128x128xf32>
    %11 = tpu.matmul %9, %10, %cst_8 {dimension_numbers = #tpu.dot_dimension_numbers<[1], [0], [0], [1], [0, 0, 1, 1], [], []>} : vector<128x128xbf16>, vector<128x128xbf16>, vector<128x128xf32> -> vector<128x128xf32>
    %c0_9 = arith.constant 0 : index
    %c0_10 = arith.constant 0 : index
    %12 = vector.load %arg5[%c0_9, %c0_10] : memref<1x128xf32, #tpu.memory_space<vmem>>, vector<1x128xf32>
    %13 = vector.broadcast %12 : vector<1x128xf32> to vector<128x128xf32>
    %14 = arith.addf %11, %13 : vector<128x128xf32>
    %cst_11 = arith.constant 0.000000e+00 : f32
    %15 = vector.broadcast %cst_11 : f32 to vector<128x128xf32>
    %16 = arith.maximumf %14, %15 : vector<128x128xf32>
    %c0_12 = arith.constant 0 : index
    %c0_13 = arith.constant 0 : index
    %17 = vector.load %arg6[%c0_12, %c0_13] : memref<1x128xf32, #tpu.memory_space<vmem>>, vector<1x128xf32>
    %18 = vector.broadcast %17 : vector<1x128xf32> to vector<128x128xf32>
    %19 = arith.mulf %16, %18 : vector<128x128xf32>
    %cst_14 = arith.constant dense<0.000000e+00> : vector<128xf32>
    %20 = vector.multi_reduction <add>, %19, %cst_14 [1] : vector<128x128xf32> to vector<128xf32>
    %21 = vector.shape_cast %20 : vector<128xf32> to vector<128x1xf32>
    %c0_15 = arith.constant 0 : index
    %22 = memref.load %arg7[%c0_15] : memref<1xf32, #tpu.memory_space<smem>>
    %23 = vector.broadcast %22 : f32 to vector<128x1xf32>
    %24 = arith.addf %21, %23 : vector<128x1xf32>
    %c0_16 = arith.constant 0 : index
    %c0_17 = arith.constant 0 : index
    %25 = vector.load %arg8[%c0_16, %c0_17] : memref<128x1xf32, #tpu.memory_space<vmem>>, vector<128x1xf32>
    tpu.vector_store %arg8[%c0_16, %c0_17], %24 {strides = array<i32>} : memref<128x1xf32, #tpu.memory_space<vmem>>, vector<128x1xf32>,
    return
  }
  func.func @transform_0(%arg0: i32) -> (i32, i32) {
    %c0_i32 = arith.constant 0 : i32
    %c0_i32_0 = arith.constant 0 : i32
    return %arg0, %c0_i32 : i32, i32
  }
  func.func @transform_1(%arg0: i32) -> (i32, i32) {
    %c0_i32 = arith.constant 0 : i32
    %c0_i32_0 = arith.constant 0 : i32
    %c0_i32_1 = arith.constant 0 : i32
    return %c0_i32, %c0_i32_0 : i32, i32
  }
  func.func @transform_2(%arg0: i32) -> (i32, i32) {
    %c0_i32 = arith.constant 0 : i32
    %c0_i32_0 = arith.constant 0 : i32
    %c0_i32_1 = arith.constant 0 : i32
    return %c0_i32, %c0_i32_0 : i32, i32
  }
  func.func @transform_3(%arg0: i32) -> (i32, i32) {
    %c0_i32 = arith.constant 0 : i32
    %c0_i32_0 = arith.constant 0 : i32
    %c0_i32_1 = arith.constant 0 : i32
    return %c0_i32, %c0_i32_0 : i32, i32
  }
  func.func @transform_4(%arg0: i32) -> (i32, i32) {
    %c0_i32 = arith.constant 0 : i32
    %c0_i32_0 = arith.constant 0 : i32
    %c0_i32_1 = arith.constant 0 : i32
    return %c0_i32, %c0_i32_0 : i32, i32
  }
  func.func @transform_5(%arg0: i32) -> (i32, i32) {
    %c0_i32 = arith.constant 0 : i32
    %c0_i32_0 = arith.constant 0 : i32
    %c0_i32_1 = arith.constant 0 : i32
    return %c0_i32, %c0_i32_0 : i32, i32
  }
  func.func @transform_6(%arg0: i32) -> i32 {
    %c0_i32 = arith.constant 0 : i32
    %c0_i32_0 = arith.constant 0 : i32
    return %c0_i32 : i32
  }
  func.func @transform_7(%arg0: i32) -> (i32, i32) {
    %c0_i32 = arith.constant 0 : i32
    %c0_i32_0 = arith.constant 0 : i32
    return %arg0, %c0_i32 : i32, i32
  }
}

</mosaic_0001>

<llo_original>
// kernel: _critic_pallas.1
$region0: #{_critic_pallas.1}
  #allocation0 [shape = 'u32[]', space=smem, size = 0x4, offset = 0x4, fixed_abs, tag = 'smem constant byte address 0x4 - core index']
  #allocation1 [shape = 'u32[144,128]{1,0:T(1,128)}', space=vmem, size = 0x12000, scoped, tag = 'internal scratch']
  #allocation2 [shape = 'f32[1]{0:T(128)S(6)}', space=smem, size = 0x200, scoped, tag = 'scoped memory for _critic_pallas.1']
  %s0 = inlined_call_operand.vmem [shape: f32[128,32], index: 0, kind: input, shape index: {}]
  %s1 = inlined_call_operand.vmem [shape: bf16[32,128], index: 1, kind: input, shape index: {}]
  %s2 = inlined_call_operand.vmem [shape: f32[1,128], index: 2, kind: input, shape index: {}]
  %s3 = inlined_call_operand.vmem [shape: bf16[128,128], index: 3, kind: input, shape index: {}]
  %s4 = inlined_call_operand.vmem [shape: f32[1,128], index: 4, kind: input, shape index: {}]
  %s5 = inlined_call_operand.vmem [shape: f32[1,128], index: 5, kind: input, shape index: {}]
  %s6 = inlined_call_operand.<no memory space> [shape: f32[1], index: 6, kind: input, shape index: {}]
  %s7 = inlined_call_operand.vmem [shape: f32[128,1], index: 7, kind: output, shape index: {}]
  %s8 = sld [smem:[#allocation0]]
  $region38: #{_critic_pallas.1} parent=0
    _
  %s10 = ssub.s32 1, %s8
  %s11 = scalar_select 0, %s10, %s8
  %12 = sst [smem:[#allocation2]] %s6
  // Predicated region
  $region2: #{_critic_pallas.1} parent=0 // pred_check
    _
  $region3: #{_critic_pallas.1} parent=0 // pred_check_branch
    %14 = sbr.rel (0) target = $region5
  $region4: #{_critic_pallas.1} parent=0 // pred_region
    _
  $region5: #{_critic_pallas.1} parent=0 // pred_fallthru
    _
  // Predicated region
  $region6: #{_critic_pallas.1} parent=0 // pred_check
    _
  $region7: #{_critic_pallas.1} parent=0 // pred_check_branch
    %16 = sbr.rel (0) target = $region9
  $region8: #{_critic_pallas.1} parent=0 // pred_region
    _
  $region9: #{_critic_pallas.1} parent=0 // pred_fallthru
    _
  // Predicated region
  $region10: #{_critic_pallas.1} parent=0 // pred_check
    _
  $region11: #{_critic_pallas.1} parent=0 // pred_check_branch
    %18 = sbr.rel (0) target = $region13
  $region12: #{_critic_pallas.1} parent=0 // pred_region
    _
  $region13: #{_critic_pallas.1} parent=0 // pred_fallthru
    _
  // Predicated region
  $region14: #{_critic_pallas.1} parent=0 // pred_check
    _
  $region15: #{_critic_pallas.1} parent=0 // pred_check_branch
    %20 = sbr.rel (0) target = $region17
  $region16: #{_critic_pallas.1} parent=0 // pred_region
    _
  $region17: #{_critic_pallas.1} parent=0 // pred_fallthru
    _
  // Predicated region
  $region18: #{_critic_pallas.1} parent=0 // pred_check
    _
  $region19: #{_critic_pallas.1} parent=0 // pred_check_branch
    %22 = sbr.rel (0) target = $region21
  $region20: #{_critic_pallas.1} parent=0 // pred_region
    _
  $region21: #{_critic_pallas.1} parent=0 // pred_fallthru
    _
  // Predicated region
  $region22: #{_critic_pallas.1} parent=0 // pred_check
    _
  $region23: #{_critic_pallas.1} parent=0 // pred_check_branch
    %24 = sbr.rel (0) target = $region25
  $region24: #{_critic_pallas.1} parent=0 // pred_region
    _
  $region25: #{_critic_pallas.1} parent=0 // pred_fallthru
    _
  // Predicated region
  $region26: #{_critic_pallas.1} parent=0 // pred_check
    _
  $region27: #{_critic_pallas.1} parent=0 // pred_check_branch
    %26 = sbr.rel (0) target = $region29
  $region28: #{_critic_pallas.1} parent=0 // pred_region
    _
  $region29: #{_critic_pallas.1} parent=0 // pred_fallthru
    _
  %v28 = vld [vmem:[%s0] sm:$0xff]
  %v29 = vld [vmem:[%s0 + $0x8] sm:$0xff]
  %v30 = vld [vmem:[%s0 + $0x10] sm:$0xff]
  %v31 = vld [vmem:[%s0 + $0x18] sm:$0xff]
  %v32 = vld [vmem:[%s0 + $0x20] sm:$0xff]
  %v33 = vld [vmem:[%s0 + $0x28] sm:$0xff]
  %v34 = vld [vmem:[%s0 + $0x30] sm:$0xff]
  %v35 = vld [vmem:[%s0 + $0x38] sm:$0xff]
  %v36 = vld [vmem:[%s0 + $0x40] sm:$0xff]
  %v37 = vld [vmem:[%s0 + $0x48] sm:$0xff]
  %v38 = vld [vmem:[%s0 + $0x50] sm:$0xff]
  %v39 = vld [vmem:[%s0 + $0x58] sm:$0xff]
  %v40 = vld [vmem:[%s0 + $0x60] sm:$0xff]
  %v41 = vld [vmem:[%s0 + $0x68] sm:$0xff]
  %v42 = vld [vmem:[%s0 + $0x70] sm:$0xff]
  %v43 = vld [vmem:[%s0 + $0x78] sm:$0xff]
  %v44 = vpack.c.bf16 %v29, %v28
  %v45 = vpack.c.bf16 %v31, %v30
  %v46 = vpack.c.bf16 %v33, %v32
  %v47 = vpack.c.bf16 %v35, %v34
  %v48 = vpack.c.bf16 %v37, %v36
  %v49 = vpack.c.bf16 %v39, %v38
  %v50 = vpack.c.bf16 %v41, %v40
  %v51 = vpack.c.bf16 %v43, %v42
  %v52 = vld [vmem:[%s1] sm:$0xf]
  %v53 = vld [vmem:[%s1 + $0x4] sm:$0xf]
  %v54 = vld [vmem:[%s1 + $0x8] sm:$0xf]
  %v55 = vld [vmem:[%s1 + $0xc] sm:$0xf]
  %v56 = vld [vmem:[%s2] sm:$0x1]
  %v58 = vlaneseq
  %v59 = vshrl.u32 %v58, 7
  %v60 = vsub.s32 0, %v59
  %v61 = vrot.slane %v56, %v60
  %v67 = vunpack.c.l.b16 %v52
  %v68 = vunpack.c.l.b16 %v53
  %v69 = vunpack.c.l.b16 %v54
  %v70 = vunpack.c.l.b16 %v55
  %v71 = vpack.c.b16 %v68, %v67
  %v72 = vpack.c.b16 %v70, %v69
  %vm75 = vcmask 261120
  %v77 = vsel %vm75, %v44, 0
  %v80 = vsel %vm75, %v45, 0
  %v83 = vsel %vm75, %v46, 0
  %v86 = vsel %vm75, %v47, 0
  %v89 = vsel %vm75, %v48, 0
  %v92 = vsel %vm75, %v49, 0
  %v95 = vsel %vm75, %v50, 0
  %v98 = vsel %vm75, %v51, 0
  %100 = vmatprep.subr.bf16.mxu0 0
  %101 = vmatpush1.bf16.msra.mxu0 %v71
  %102 = vmatprep.subr.bf16.mxu0 0
  %103 = vmatpush1.bf16.msra.mxu0 %v72
  %104 = vmatprep.subr.bf16.mxu0 0
  %105 = vmatpush1.bf16.msra.mxu0 0
  %106 = vmatprep.subr.bf16.mxu0 0
  %107 = vmatpush1.bf16.msra.mxu0 0
  %108 = vmatprep.subr.bf16.mxu0 0
  %109 = vmatpush1.bf16.msra.mxu0 0
  %110 = vmatprep.subr.bf16.mxu0 0
  %111 = vmatpush1.bf16.msra.mxu0 0
  %112 = vmatprep.subr.bf16.mxu0 0
  %113 = vmatpush1.bf16.msra.mxu0 0
  %114 = vmatprep.subr.bf16.mxu0 0
  %115 = vmatpush1.bf16.msra.mxu0 0
  %116 = vmatprep.subr.bf16.mxu0 0
  %117 = vmatpush1.bf16.msra.mxu0 0
  %118 = vmatprep.subr.bf16.mxu0 0
  %119 = vmatpush1.bf16.msra.mxu0 0
  %120 = vmatprep.subr.bf16.mxu0 0
  %121 = vmatpush1.bf16.msra.mxu0 0
  %122 = vmatprep.subr.bf16.mxu0 0
  %123 = vmatpush1.bf16.msra.mxu0 0
  %124 = vmatprep.subr.bf16.mxu0 0
  %125 = vmatpush1.bf16.msra.mxu0 0
  %126 = vmatprep.subr.bf16.mxu0 0
  %127 = vmatpush1.bf16.msra.mxu0 0
  %128 = vmatprep.subr.bf16.mxu0 0
  %129 = vmatpush1.bf16.msra.mxu0 0
  %130 = vmatprep.subr.bf16.mxu0 0
  %131 = vmatpush1.bf16.msra.mxu0 0
  %132 = vmatprep.mubr.bf16.mxu0 0
  %133 = vmatmul.mubr.bf16.gmra.mrb[0].mxu0 %v77
  %v134 = vpop.f32.mrb[0].mxu0
  %v135 = vadd.f32 %v61, %v134
  %v136 = vpop.f32.mrb[0].mxu0
  %v137 = vpop.f32.mrb[0].mxu0
  %v138 = vadd.f32 %v61, %v137
  %v139 = vpop.f32.mrb[0].mxu0
  %140 = vmatprep.mubr.bf16.mxu0 0
  %141 = vmatmul.mubr.bf16.gmra.mrb[0].mxu0 %v80
  %v142 = vpop.f32.mrb[0].mxu0
  %v143 = vadd.f32 %v61, %v142
  %v144 = vpop.f32.mrb[0].mxu0
  %v145 = vpop.f32.mrb[0].mxu0
  %v146 = vadd.f32 %v61, %v145
  %v147 = vpop.f32.mrb[0].mxu0
  %148 = vmatprep.mubr.bf16.mxu0 0
  %149 = vmatmul.mubr.bf16.gmra.mrb[0].mxu0 %v83
  %v150 = vpop.f32.mrb[0].mxu0
  %v151 = vadd.f32 %v61, %v150
  %v152 = vpop.f32.mrb[0].mxu0
  %v153 = vpop.f32.mrb[0].mxu0
  %v154 = vadd.f32 %v61, %v153
  %v155 = vpop.f32.mrb[0].mxu0
  %156 = vmatprep.mubr.bf16.mxu0 0
  %157 = vmatmul.mubr.bf16.gmra.mrb[0].mxu0 %v86
  %v158 = vpop.f32.mrb[0].mxu0
  %v159 = vadd.f32 %v61, %v158
  %v160 = vpop.f32.mrb[0].mxu0
  %v161 = vpop.f32.mrb[0].mxu0
  %v162 = vadd.f32 %v61, %v161
  %v163 = vpop.f32.mrb[0].mxu0
  %164 = vmatprep.mubr.bf16.mxu0 0
  %165 = vmatmul.mubr.bf16.gmra.mrb[0].mxu0 %v89
  %v166 = vpop.f32.mrb[0].mxu0
  %v167 = vadd.f32 %v61, %v166
  %v168 = vpop.f32.mrb[0].mxu0
  %v169 = vpop.f32.mrb[0].mxu0
  %v170 = vadd.f32 %v61, %v169
  %v171 = vpop.f32.mrb[0].mxu0
  %172 = vmatprep.mubr.bf16.mxu0 0
  %173 = vmatmul.mubr.bf16.gmra.mrb[0].mxu0 %v92
  %v174 = vpop.f32.mrb[0].mxu0
  %v175 = vadd.f32 %v61, %v174
  %v176 = vpop.f32.mrb[0].mxu0
  %v177 = vpop.f32.mrb[0].mxu0
  %v178 = vadd.f32 %v61, %v177
  %v179 = vpop.f32.mrb[0].mxu0
  %180 = vmatprep.mubr.bf16.mxu0 0
  %181 = vmatmul.mubr.bf16.gmra.mrb[0].mxu0 %v95
  %v182 = vpop.f32.mrb[0].mxu0
  %v183 = vadd.f32 %v61, %v182
  %v184 = vpop.f32.mrb[0].mxu0
  %v185 = vpop.f32.mrb[0].mxu0
  %v186 = vadd.f32 %v61, %v185
  %v187 = vpop.f32.mrb[0].mxu0
  %188 = vmatprep.mubr.bf16.mxu0 0
  %189 = vmatmul.mubr.bf16.gmra.mrb[0].mxu0 %v98
  %v190 = vpop.f32.mrb[0].mxu0
  %v191 = vadd.f32 %v61, %v190
  %v192 = vpop.f32.mrb[0].mxu0
  %v193 = vpop.f32.mrb[0].mxu0
  %v194 = vadd.f32 %v61, %v193
  %v195 = vpop.f32.mrb[0].mxu0
  %196 = vdwg.mxu0
  %v197 = vmax.f32 %v135, 0.0
  %v198 = vmax.f32 %v138, 0.0
  %v199 = vmax.f32 %v143, 0.0
  %v200 = vmax.f32 %v146, 0.0
  %v201 = vmax.f32 %v151, 0.0
  %v202 = vmax.f32 %v154, 0.0
  %v203 = vmax.f32 %v159, 0.0
  %v204 = vmax.f32 %v162, 0.0
  %v205 = vmax.f32 %v167, 0.0
  %v206 = vmax.f32 %v170, 0.0
  %v207 = vmax.f32 %v175, 0.0
  %v208 = vmax.f32 %v178, 0.0
  %v209 = vmax.f32 %v183, 0.0
  %v210 = vmax.f32 %v186, 0.0
  %v211 = vmax.f32 %v191, 0.0
  %v212 = vmax.f32 %v194, 0.0
  %v213 = vpack.c.bf16 %v198, %v197
  %v214 = vpack.c.bf16 %v200, %v199
  %v215 = vpack.c.bf16 %v202, %v201
  %v216 = vpack.c.bf16 %v204, %v203
  %v217 = vpack.c.bf16 %v206, %v205
  %v218 = vpack.c.bf16 %v208, %v207
  %v219 = vpack.c.bf16 %v210, %v209
  %v220 = vpack.c.bf16 %v212, %v211
  %v221 = vld [vmem:[%s3] sm:$0xf]
  %v222 = vld [vmem:[%s3 + $0x4] sm:$0xf]
  %v223 = vld [vmem:[%s3 + $0x8] sm:$0xf]
  %v224 = vld [vmem:[%s3 + $0xc] sm:$0xf]
  %v225 = vld [vmem:[%s3 + $0x10] sm:$0xf]
  %v226 = vld [vmem:[%s3 + $0x14] sm:$0xf]
  %v227 = vld [vmem:[%s3 + $0x18] sm:$0xf]
  %v228 = vld [vmem:[%s3 + $0x1c] sm:$0xf]
  %v229 = vld [vmem:[%s3 + $0x20] sm:$0xf]
  %v230 = vld [vmem:[%s3 + $0x24] sm:$0xf]
  %v231 = vld [vmem:[%s3 + $0x28] sm:$0xf]
  %v232 = vld [vmem:[%s3 + $0x2c] sm:$0xf]
  %v233 = vld [vmem:[%s3 + $0x30] sm:$0xf]
  %v234 = vld [vmem:[%s3 + $0x34] sm:$0xf]
  %v235 = vld [vmem:[%s3 + $0x38] sm:$0xf]
  %v236 = vld [vmem:[%s3 + $0x3c] sm:$0xf]
  %v237 = vld [vmem:[%s4] sm:$0x1]
  %v239 = vlaneseq
  %v240 = vshrl.u32 %v239, 7
  %v241 = vsub.s32 0, %v240
  %v242 = vrot.slane %v237, %v241
  %v260 = vunpack.c.l.b16 %v221
  %v261 = vunpack.c.l.b16 %v222
  %v262 = vunpack.c.l.b16 %v223
  %v263 = vunpack.c.l.b16 %v224
  %v264 = vunpack.c.l.b16 %v225
  %v265 = vunpack.c.l.b16 %v226
  %v266 = vunpack.c.l.b16 %v227
  %v267 = vunpack.c.l.b16 %v228
  %v268 = vunpack.c.l.b16 %v229
  %v269 = vunpack.c.l.b16 %v230
  %v270 = vunpack.c.l.b16 %v231
  %v271 = vunpack.c.l.b16 %v232
  %v272 = vunpack.c.l.b16 %v233
  %v273 = vunpack.c.l.b16 %v234
  %v274 = vunpack.c.l.b16 %v235
  %v275 = vunpack.c.l.b16 %v236
  %v276 = vpack.c.b16 %v261, %v260
  %v277 = vpack.c.b16 %v263, %v262
  %v278 = vpack.c.b16 %v265, %v264
  %v279 = vpack.c.b16 %v267, %v266
  %v280 = vpack.c.b16 %v269, %v268
  %v281 = vpack.c.b16 %v271, %v270
  %v282 = vpack.c.b16 %v273, %v272
  %v283 = vpack.c.b16 %v275, %v274
  %292 = vmatprep.subr.bf16.mxu0 0
  %293 = vmatpush1.bf16.msra.mxu0 %v276
  %294 = vmatprep.subr.bf16.mxu0 0
  %295 = vmatpush1.bf16.msra.mxu0 %v277
  %296 = vmatprep.subr.bf16.mxu0 0
  %297 = vmatpush1.bf16.msra.mxu0 %v278
  %298 = vmatprep.subr.bf16.mxu0 0
  %299 = vmatpush1.bf16.msra.mxu0 %v279
  %300 = vmatprep.subr.bf16.mxu0 0
  %301 = vmatpush1.bf16.msra.mxu0 %v280
  %302 = vmatprep.subr.bf16.mxu0 0
  %303 = vmatpush1.bf16.msra.mxu0 %v281
  %304 = vmatprep.subr.bf16.mxu0 0
  %305 = vmatpush1.bf16.msra.mxu0 %v282
  %306 = vmatprep.subr.bf16.mxu0 0
  %307 = vmatpush1.bf16.msra.mxu0 %v283
  %308 = vmatprep.subr.bf16.mxu0 0
  %309 = vmatpush1.bf16.msra.mxu0 0
  %310 = vmatprep.subr.bf16.mxu0 0
  %311 = vmatpush1.bf16.msra.mxu0 0
  %312 = vmatprep.subr.bf16.mxu0 0
  %313 = vmatpush1.bf16.msra.mxu0 0
  %314 = vmatprep.subr.bf16.mxu0 0
  %315 = vmatpush1.bf16.msra.mxu0 0
  %316 = vmatprep.subr.bf16.mxu0 0
  %317 = vmatpush1.bf16.msra.mxu0 0
  %318 = vmatprep.subr.bf16.mxu0 0
  %319 = vmatpush1.bf16.msra.mxu0 0
  %320 = vmatprep.subr.bf16.mxu0 0
  %321 = vmatpush1.bf16.msra.mxu0 0
  %322 = vmatprep.subr.bf16.mxu0 0
  %323 = vmatpush1.bf16.msra.mxu0 0
  %324 = vmatprep.mubr.bf16.mxu0 0
  %325 = vmatmul.mubr.bf16.gmra.mrb[0].mxu0 %v213
  %v326 = vpop.f32.mrb[0].mxu0
  %v327 = vadd.f32 %v242, %v326
  %v328 = vpop.f32.mrb[0].mxu0
  %v329 = vpop.f32.mrb[0].mxu0
  %v330 = vadd.f32 %v242, %v329
  %v331 = vpop.f32.mrb[0].mxu0
  %332 = vmatprep.mubr.bf16.mxu0 0
  %333 = vmatmul.mubr.bf16.gmra.mrb[0].mxu0 %v214
  %v334 = vpop.f32.mrb[0].mxu0
  %v335 = vadd.f32 %v242, %v334
  %v336 = vpop.f32.mrb[0].mxu0
  %v337 = vpop.f32.mrb[0].mxu0
  %v338 = vadd.f32 %v242, %v337
  %v339 = vpop.f32.mrb[0].mxu0
  %340 = vmatprep.mubr.bf16.mxu0 0
  %341 = vmatmul.mubr.bf16.gmra.mrb[0].mxu0 %v215
  %v342 = vpop.f32.mrb[0].mxu0
  %v343 = vadd.f32 %v242, %v342
  %v344 = vpop.f32.mrb[0].mxu0
  %v345 = vpop.f32.mrb[0].mxu0
  %v346 = vadd.f32 %v242, %v345
  %v347 = vpop.f32.mrb[0].mxu0
  %348 = vmatprep.mubr.bf16.mxu0 0
  %349 = vmatmul.mubr.bf16.gmra.mrb[0].mxu0 %v216
  %v350 = vpop.f32.mrb[0].mxu0
  %v351 = vadd.f32 %v242, %v350
  %v352 = vpop.f32.mrb[0].mxu0
  %v353 = vpop.f32.mrb[0].mxu0
  %v354 = vadd.f32 %v242, %v353
  %v355 = vpop.f32.mrb[0].mxu0
  %356 = vmatprep.mubr.bf16.mxu0 0
  %357 = vmatmul.mubr.bf16.gmra.mrb[0].mxu0 %v217
  %v358 = vpop.f32.mrb[0].mxu0
  %v359 = vadd.f32 %v242, %v358
  %v360 = vpop.f32.mrb[0].mxu0
  %v361 = vpop.f32.mrb[0].mxu0
  %v362 = vadd.f32 %v242, %v361
  %v363 = vpop.f32.mrb[0].mxu0
  %364 = vmatprep.mubr.bf16.mxu0 0
  %365 = vmatmul.mubr.bf16.gmra.mrb[0].mxu0 %v218
  %v366 = vpop.f32.mrb[0].mxu0
  %v367 = vadd.f32 %v242, %v366
  %v368 = vpop.f32.mrb[0].mxu0
  %v369 = vpop.f32.mrb[0].mxu0
  %v370 = vadd.f32 %v242, %v369
  %v371 = vpop.f32.mrb[0].mxu0
  %372 = vmatprep.mubr.bf16.mxu0 0
  %373 = vmatmul.mubr.bf16.gmra.mrb[0].mxu0 %v219
  %v374 = vpop.f32.mrb[0].mxu0
  %v375 = vadd.f32 %v242, %v374
  %v376 = vpop.f32.mrb[0].mxu0
  %v377 = vpop.f32.mrb[0].mxu0
  %v378 = vadd.f32 %v242, %v377
  %v379 = vpop.f32.mrb[0].mxu0
  %380 = vmatprep.mubr.bf16.mxu0 0
  %381 = vmatmul.mubr.bf16.gmra.mrb[0].mxu0 %v220
  %v382 = vpop.f32.mrb[0].mxu0
  %v383 = vadd.f32 %v242, %v382
  %v384 = vpop.f32.mrb[0].mxu0
  %v385 = vpop.f32.mrb[0].mxu0
  %v386 = vadd.f32 %v242, %v385
  %v387 = vpop.f32.mrb[0].mxu0
  %388 = vdwg.mxu0
  %v389 = vmax.f32 %v327, 0.0
  %v390 = vmax.f32 %v330, 0.0
  %v391 = vmax.f32 %v335, 0.0
  %v392 = vmax.f32 %v338, 0.0
  %v393 = vmax.f32 %v343, 0.0
  %v394 = vmax.f32 %v346, 0.0
  %v395 = vmax.f32 %v351, 0.0
  %v396 = vmax.f32 %v354, 0.0
  %v397 = vmax.f32 %v359, 0.0
  %v398 = vmax.f32 %v362, 0.0
  %v399 = vmax.f32 %v367, 0.0
  %v400 = vmax.f32 %v370, 0.0
  %v401 = vmax.f32 %v375, 0.0
  %v402 = vmax.f32 %v378, 0.0
  %v403 = vmax.f32 %v383, 0.0
  %v404 = vmax.f32 %v386, 0.0
  %v405 = vld [vmem:[%s5] sm:$0x1]
  %v407 = vlaneseq
  %v408 = vshrl.u32 %v407, 7
  %v409 = vsub.s32 0, %v408
  %v410 = vrot.slane %v405, %v409
  %v412 = vmul.f32 %v389, %v410
  %v413 = vmul.f32 %v390, %v410
  %v414 = vmul.f32 %v391, %v410
  %v415 = vmul.f32 %v392, %v410
  %v416 = vmul.f32 %v393, %v410
  %v417 = vmul.f32 %v394, %v410
  %v418 = vmul.f32 %v395, %v410
  %v419 = vmul.f32 %v396, %v410
  %v420 = vmul.f32 %v397, %v410
  %v421 = vmul.f32 %v398, %v410
  %v422 = vmul.f32 %v399, %v410
  %v423 = vmul.f32 %v400, %v410
  %v424 = vmul.f32 %v401, %v410
  %v425 = vmul.f32 %v402, %v410
  %v426 = vmul.f32 %v403, %v410
  %v427 = vmul.f32 %v404, %v410
  %428 = vadd.xlane.f32.xlu0 %v412
  %v429 = vpop.xlane.xlu0 %428
  %430 = vadd.xlane.f32.xlu0 %v413
  %v431 = vpop.xlane.xlu0 %430
  %432 = vadd.xlane.f32.xlu0 %v414
  %v433 = vpop.xlane.xlu0 %432
  %434 = vadd.xlane.f32.xlu0 %v415
  %v435 = vpop.xlane.xlu0 %434
  %436 = vadd.xlane.f32.xlu0 %v416
  %v437 = vpop.xlane.xlu0 %436
  %438 = vadd.xlane.f32.xlu0 %v417
  %v439 = vpop.xlane.xlu0 %438
  %440 = vadd.xlane.f32.xlu0 %v418
  %v441 = vpop.xlane.xlu0 %440
  %442 = vadd.xlane.f32.xlu0 %v419
  %v443 = vpop.xlane.xlu0 %442
  %444 = vadd.xlane.f32.xlu0 %v420
  %v445 = vpop.xlane.xlu0 %444
  %446 = vadd.xlane.f32.xlu0 %v421
  %v447 = vpop.xlane.xlu0 %446
  %448 = vadd.xlane.f32.xlu0 %v422
  %v449 = vpop.xlane.xlu0 %448
  %450 = vadd.xlane.f32.xlu0 %v423
  %v451 = vpop.xlane.xlu0 %450
  %452 = vadd.xlane.f32.xlu0 %v424
  %v453 = vpop.xlane.xlu0 %452
  %454 = vadd.xlane.f32.xlu0 %v425
  %v455 = vpop.xlane.xlu0 %454
  %456 = vadd.xlane.f32.xlu0 %v426
  %v457 = vpop.xlane.xlu0 %456
  %458 = vadd.xlane.f32.xlu0 %v427
  %v459 = vpop.xlane.xlu0 %458
  %s460 = sld [smem:[#allocation2]]
  %v461 = vstv %s460
  %v462 = vadd.f32 %v429, %v461
  %v463 = vadd.f32 %v431, %v461
  %v464 = vadd.f32 %v433, %v461
  %v465 = vadd.f32 %v435, %v461
  %v466 = vadd.f32 %v437, %v461
  %v467 = vadd.f32 %v439, %v461
  %v468 = vadd.f32 %v441, %v461
  %v469 = vadd.f32 %v443, %v461
  %v470 = vadd.f32 %v445, %v461
  %v471 = vadd.f32 %v447, %v461
  %v472 = vadd.f32 %v449, %v461
  %v473 = vadd.f32 %v451, %v461
  %v474 = vadd.f32 %v453, %v461
  %v475 = vadd.f32 %v455, %v461
  %v476 = vadd.f32 %v457, %v461
  %v477 = vadd.f32 %v459, %v461
  %vm478 = vcmask 7168
  %479 = vst.msk [vmem:[%s7] sm:$0xff] %vm478, %v462
  %480 = vst.msk [vmem:[%s7 + $0x8] sm:$0xff] %vm478, %v463
  %481 = vst.msk [vmem:[%s7 + $0x10] sm:$0xff] %vm478, %v464
  %482 = vst.msk [vmem:[%s7 + $0x18] sm:$0xff] %vm478, %v465
  %483 = vst.msk [vmem:[%s7 + $0x20] sm:$0xff] %vm478, %v466
  %484 = vst.msk [vmem:[%s7 + $0x28] sm:$0xff] %vm478, %v467
  %485 = vst.msk [vmem:[%s7 + $0x30] sm:$0xff] %vm478, %v468
  %486 = vst.msk [vmem:[%s7 + $0x38] sm:$0xff] %vm478, %v469
  %487 = vst.msk [vmem:[%s7 + $0x40] sm:$0xff] %vm478, %v470
  %488 = vst.msk [vmem:[%s7 + $0x48] sm:$0xff] %vm478, %v471
  %489 = vst.msk [vmem:[%s7 + $0x50] sm:$0xff] %vm478, %v472
  %490 = vst.msk [vmem:[%s7 + $0x58] sm:$0xff] %vm478, %v473
  %491 = vst.msk [vmem:[%s7 + $0x60] sm:$0xff] %vm478, %v474
  %492 = vst.msk [vmem:[%s7 + $0x68] sm:$0xff] %vm478, %v475
  %493 = vst.msk [vmem:[%s7 + $0x70] sm:$0xff] %vm478, %v476
  %494 = vst.msk [vmem:[%s7 + $0x78] sm:$0xff] %vm478, %v477
  // Predicated region
  $region30: #{_critic_pallas.1} parent=0 // pred_check
    _
  $region31: #{_critic_pallas.1} parent=0 // pred_check_branch
    %496 = sbr.rel (0) target = $region33
  $region32: #{_critic_pallas.1} parent=0 // pred_region
    _
  $region33: #{_critic_pallas.1} parent=0 // pred_fallthru
    _
  // Predicated region
  $region34: #{_critic_pallas.1} parent=0 // pred_check
    _
  $region35: #{_critic_pallas.1} parent=0 // pred_check_branch
    %498 = sbr.rel (0) target = $region37
  $region36: #{_critic_pallas.1} parent=0 // pred_region
    _
  $region37: #{_critic_pallas.1} parent=0 // pred_fallthru
    _

</llo_original>
